<compile_context>
chip_gen: v7x
topology: tpu7x:2x2x1
jax: 0.10.0
libtpu: 0.0.40
codegen_flags: <defaults>
</compile_context>

<pallas_src>
import jax
import jax.numpy as jnp
from jax import lax
from jax.experimental import pallas as pl
from jax.experimental.pallas import tpu as pltpu


_NEG = -1e30  # "minus infinity" that stays finite through exp/log


def _make_kernel(C, c_tile, bs):
    """Kernel over grid (num_loss, num_class_tiles); logits block is (bs, c_tile)."""
    rem = C % c_tile  # python int: 0 -> class dim divides evenly, no masking

    def kernel(tl_ref, x_ref, out_ref, m_sc, s_sc):
        j = pl.program_id(1)
        nj = pl.num_programs(1)

        # reset per-head online-softmax state at the start of every head
        @pl.when(j == 0)
        def _init():
            m_sc[...] = jnp.full_like(m_sc, _NEG)
            s_sc[...] = jnp.zeros_like(s_sc)

        x = x_ref[...].astype(jnp.float32)          # (bs, c_tile), f32 math

        def update(x_tile, valid):
            xm = x_tile if valid is None else jnp.where(valid, x_tile, _NEG)
            tile_max = jnp.max(xm, axis=1, keepdims=True)            # (bs, 1)
            m_new = jnp.maximum(m_sc[...], tile_max)
            e = jnp.exp(xm - m_new)
            if valid is not None:
                e = jnp.where(valid, e, 0.0)        # robust: padding adds exactly 0
            s_sc[...] = (s_sc[...] * jnp.exp(m_sc[...] - m_new)
                         + jnp.sum(e, axis=1, keepdims=True))
            m_sc[...] = m_new

        if rem == 0:
            update(x, None)                          # no masking anywhere
        else:
            # only the last class tile is ragged -> mask only there
            @pl.when(j < nj - 1)
            def _full_tile():
                update(x, None)

            @pl.when(j == nj - 1)
            def _tail_tile():
                col = lax.broadcasted_iota(jnp.int32, x.shape, 1)
                update(x, col < rem)

        # finalize this head: per-sample CE -> batch mean -> per-head output
        @pl.when(j == nj - 1)
        def _finalize():
            lse = m_sc[...] + jnp.log(s_sc[...])     # (bs, 1)
            per_sample = lse - tl_ref[...]           # (bs, 1) CE losses
            out_ref[...] = jnp.sum(per_sample, axis=0, keepdims=True) * (1.0 / bs)

    return kernel


def mulpos_cross_entropy(inputs, targets, lam, *, c_tile=None,
                         vmem_budget_bytes=32 * 1024 * 1024,
                         layout="auto"):
    """inputs: (bs, num_loss, C) float; targets: (bs,) int; lam: (num_loss,)."""
    bs, num_loss, C = inputs.shape
    itemsize = jnp.dtype(inputs.dtype).itemsize

    # ---- class-tile selection: biggest tile whose double-buffered logits block
    #      stays within the VMEM budget (v7x-safe), capped at 8192 -------------
    if c_tile is None:
        max_by_vmem = max(512, vmem_budget_bytes // (2 * bs * itemsize))
        c_tile = min(8192, (max_by_vmem // 128) * 128)
    if C <= c_tile:
        c_tile = C                                   # single tile, full dim
    else:
        c_tile = max(128, (c_tile // 128) * 128)     # multiple of the lane width
    n_ct = pl.cdiv(C, c_tile)

    # ---- tiny O(bs*num_loss) precomputations: target logits + lam ------------
    tgt = targets.astype(jnp.int32)
    tl = jnp.take_along_axis(inputs, tgt[:, None, None], axis=-1)   # (bs, nl, 1)
    tl = jnp.transpose(tl, (1, 0, 2)).astype(jnp.float32)           # (nl, bs, 1)
    lam = jnp.asarray(lam, jnp.float32).reshape(num_loss)

    kernel = _make_kernel(C, c_tile, bs)
    cost = pl.CostEstimate(flops=6 * bs * num_loss * C,
                           transcendentals=bs * num_loss * C,
                           bytes_accessed=bs * num_loss * C * itemsize)

    def build(x, x_spec):
        return pl.pallas_call(
            kernel,
            out_shape=jax.ShapeDtypeStruct((num_loss, 1, 1), jnp.float32),
            grid_spec=pltpu.PrefetchScalarGridSpec(
                num_scalar_prefetch=0,
                grid=(num_loss, n_ct),
                in_specs=[
                    pl.BlockSpec((None, bs, 1), lambda i, j: (i, 0, 0)),   # tgt logit
                    x_spec,                                                # logits
                ],
                out_specs=pl.BlockSpec((None, 1, 1), lambda i, j: (i, 0, 0)),
                scratch_shapes=[
                    pltpu.VMEM((bs, 1), jnp.float32),   # running max
                    pltpu.VMEM((bs, 1), jnp.float32),   # running sum(exp)
                ],
            ),
            compiler_params=pltpu.CompilerParams(
                dimension_semantics=("parallel", "arbitrary"),  # heads across TCs
                vmem_limit_bytes=48 * 1024 * 1024),
            cost_estimate=cost,
        )(tl, x)

    losses = None
    if layout in ("auto", "direct"):
        # Read (bs, num_loss, C) directly; the size-1 head dim is squeezed out
        # of the block, so the kernel sees a dense (bs, c_tile) tile.
        direct_spec = pl.BlockSpec((bs, None, c_tile), lambda i, j: (0, i, j))
        if layout == "direct":
            losses = build(inputs, direct_spec)
        else:
            try:
                losses = build(inputs, direct_spec)
            except Exception:   # spec rejected on this Pallas version -> fallback
                losses = None
    if losses is None:
        # Fallback: one head-major copy in the wrapper; same kernel body.
        x_t = jnp.transpose(inputs, (1, 0, 2))                       # (nl, bs, C)
        t_spec = pl.BlockSpec((None, bs, c_tile), lambda i, j: (i, 0, j))
        losses = build(x_t, t_spec)

    return jnp.sum(lam * losses[:, 0, 0])


def _reference(inputs, targets, lam):
    x = inputs.astype(jnp.float32)
    logp = jax.nn.log_softmax(x, axis=-1)
    nll = -jnp.take_along_axis(logp, targets[:, None, None].astype(jnp.int32),
                               axis=-1)[..., 0]
    losses = jnp.mean(nll, axis=0)                  # (num_loss,)
    return jnp.sum(jnp.asarray(lam, jnp.float32) * losses)


if __name__ == "__main__":
    # Small stand-in shapes for bs x 2 x (1 + 65536): bs=4, num_loss=2, C=513
    bs, num_loss, C = 4, 2, 513
    key = jax.random.PRNGKey(0)
    k1, k2 = jax.random.split(key)
    inputs = jax.random.normal(k1, (bs, num_loss, C), dtype=jnp.float32)
    targets = jax.random.randint(k2, (bs,), 0, C, dtype=jnp.int32)
    lam = jnp.array([0.7, 0.3], dtype=jnp.float32)

    ref = _reference(inputs, targets, lam)

    # 1) default config: single class tile (C fits in one tile), no masking
    out1 = jax.block_until_ready(mulpos_cross_entropy(inputs, targets, lam))
    assert jnp.allclose(out1, ref, rtol=1e-4, atol=1e-4), (out1, ref)

    # 2) multi-tile class reduction with a ragged tail (513 = 4*128 + 1)
    out2 = jax.block_until_ready(
        mulpos_cross_entropy(inputs, targets, lam, c_tile=128))
    assert jnp.allclose(out2, ref, rtol=1e-4, atol=1e-4), (out2, ref)

    # 3) bf16 logits kept native in HBM, f32 math inside the kernel
    inputs_bf16 = inputs.astype(jnp.bfloat16)
    ref_bf16 = _reference(inputs_bf16, targets, lam)
    out3 = jax.block_until_ready(
        mulpos_cross_entropy(inputs_bf16, targets, lam, c_tile=256))
    assert jnp.allclose(out3, ref_bf16, rtol=1e-3, atol=1e-3), (out3, ref_bf16)

    print("KERNEL_OK")
</pallas_src>

<mosaic_0001>
module attributes {stable_mosaic.version = 11 : i64} {
  func.func @kernel(%arg0: i32, %arg1: i32, %arg2: memref<1x4x1xf32, #tpu.memory_space<vmem>>, %arg3: memref<1x4x513xf32, #tpu.memory_space<vmem>>, %arg4: memref<1x1x1xf32, #tpu.memory_space<vmem>>, %arg5: memref<4x1xf32, #tpu.memory_space<vmem>>, %arg6: memref<4x1xf32, #tpu.memory_space<vmem>>) attributes {dimension_semantics = [#tpu.dimension_semantics<parallel>, #tpu.dimension_semantics<arbitrary>], iteration_bounds = array<i64: 2, 1>, scalar_prefetch = 0 : i64, scratch_operands = 2 : i64, tpu.core_type = #tpu.core_type<tc>, window_params = [{transform_indices = @transform_0, window_bounds = array<i64: 1, 4, 1>}, {transform_indices = @transform_1, window_bounds = array<i64: 1, 4, 513>}, {transform_indices = @transform_2, window_bounds = array<i64: 1, 1, 1>}]} {
    %c0_i32 = arith.constant 0 : i32
    %0 = arith.cmpi eq, %arg1, %c0_i32 : i32
    %1 = arith.extui %0 : i1 to i32
    %c0_i32_0 = arith.constant 0 : i32
    %2 = arith.cmpi ne, %1, %c0_i32_0 : i32
    scf.if %2 {
      %cst_16 = arith.constant -1.000000e+30 : f32
      %25 = vector.broadcast %cst_16 : f32 to vector<4x1xf32>
      %c0_17 = arith.constant 0 : index
      %c0_18 = arith.constant 0 : index
      %26 = vector.load %arg5[%c0_17, %c0_18] : memref<4x1xf32, #tpu.memory_space<vmem>>, vector<4x1xf32>
      tpu.vector_store %arg5[%c0_17, %c0_18], %25 {strides = array<i32>} : memref<4x1xf32, #tpu.memory_space<vmem>>, vector<4x1xf32>,
      %cst_19 = arith.constant 0.000000e+00 : f32
      %27 = vector.broadcast %cst_19 : f32 to vector<4x1xf32>
      %c0_20 = arith.constant 0 : index
      %c0_21 = arith.constant 0 : index
      %28 = vector.load %arg6[%c0_20, %c0_21] : memref<4x1xf32, #tpu.memory_space<vmem>>, vector<4x1xf32>
      tpu.vector_store %arg6[%c0_20, %c0_21], %27 {strides = array<i32>} : memref<4x1xf32, #tpu.memory_space<vmem>>, vector<4x1xf32>,
    } else {
    }
    %c0 = arith.constant 0 : index
    %c0_1 = arith.constant 0 : index
    %c0_2 = arith.constant 0 : index
    %3 = vector.load %arg3[%c0, %c0_1, %c0_2] : memref<1x4x513xf32, #tpu.memory_space<vmem>>, vector<1x4x513xf32>
    %4 = vector.shape_cast %3 : vector<1x4x513xf32> to vector<4x513xf32>
    %cst = arith.constant dense<0xFF800000> : vector<4xf32>
    %5 = vector.multi_reduction <maximumf>, %4, %cst [1] : vector<4x513xf32> to vector<4xf32>
    %6 = vector.shape_cast %5 : vector<4xf32> to vector<4x1xf32>
    %c0_3 = arith.constant 0 : index
    %c0_4 = arith.constant 0 : index
    %7 = vector.load %arg5[%c0_3, %c0_4] : memref<4x1xf32, #tpu.memory_space<vmem>>, vector<4x1xf32>
    %8 = arith.maximumf %7, %6 : vector<4x1xf32>
    %9 = vector.broadcast %8 : vector<4x1xf32> to vector<4x513xf32>
    %10 = arith.subf %4, %9 : vector<4x513xf32>
    %11 = math.exp %10 : vector<4x513xf32>
    %c0_5 = arith.constant 0 : index
    %c0_6 = arith.constant 0 : index
    %12 = vector.load %arg6[%c0_5, %c0_6] : memref<4x1xf32, #tpu.memory_space<vmem>>, vector<4x1xf32>
    %c0_7 = arith.constant 0 : index
    %c0_8 = arith.constant 0 : index
    %13 = vector.load %arg5[%c0_7, %c0_8] : memref<4x1xf32, #tpu.memory_space<vmem>>, vector<4x1xf32>
    %14 = arith.subf %13, %8 : vector<4x1xf32>
    %15 = math.exp %14 : vector<4x1xf32>
    %16 = arith.mulf %12, %15 : vector<4x1xf32>
    %cst_9 = arith.constant dense<0.000000e+00> : vector<4xf32>
    %17 = vector.multi_reduction <add>, %11, %cst_9 [1] : vector<4x513xf32> to vector<4xf32>
    %18 = vector.shape_cast %17 : vector<4xf32> to vector<4x1xf32>
    %19 = arith.addf %16, %18 : vector<4x1xf32>
    %c0_10 = arith.constant 0 : index
    %c0_11 = arith.constant 0 : index
    %20 = vector.load %arg6[%c0_10, %c0_11] : memref<4x1xf32, #tpu.memory_space<vmem>>, vector<4x1xf32>
    tpu.vector_store %arg6[%c0_10, %c0_11], %19 {strides = array<i32>} : memref<4x1xf32, #tpu.memory_space<vmem>>, vector<4x1xf32>,
    %c0_12 = arith.constant 0 : index
    %c0_13 = arith.constant 0 : index
    %21 = vector.load %arg5[%c0_12, %c0_13] : memref<4x1xf32, #tpu.memory_space<vmem>>, vector<4x1xf32>
    tpu.vector_store %arg5[%c0_12, %c0_13], %8 {strides = array<i32>} : memref<4x1xf32, #tpu.memory_space<vmem>>, vector<4x1xf32>,
    %c0_i32_14 = arith.constant 0 : i32
    %22 = arith.cmpi eq, %arg1, %c0_i32_14 : i32
    %23 = arith.extui %22 : i1 to i32
    %c0_i32_15 = arith.constant 0 : i32
    %24 = arith.cmpi ne, %23, %c0_i32_15 : i32
    scf.if %24 {
      %c0_16 = arith.constant 0 : index
      %c0_17 = arith.constant 0 : index
      %25 = vector.load %arg5[%c0_16, %c0_17] : memref<4x1xf32, #tpu.memory_space<vmem>>, vector<4x1xf32>
      %c0_18 = arith.constant 0 : index
      %c0_19 = arith.constant 0 : index
      %26 = vector.load %arg6[%c0_18, %c0_19] : memref<4x1xf32, #tpu.memory_space<vmem>>, vector<4x1xf32>
      %27 = math.log %26 : vector<4x1xf32>
      %28 = arith.addf %25, %27 : vector<4x1xf32>
      %c0_20 = arith.constant 0 : index
      %c0_21 = arith.constant 0 : index
      %c0_22 = arith.constant 0 : index
      %29 = vector.load %arg2[%c0_20, %c0_21, %c0_22] : memref<1x4x1xf32, #tpu.memory_space<vmem>>, vector<1x4x1xf32>
      %30 = vector.shape_cast %29 : vector<1x4x1xf32> to vector<4x1xf32>
      %31 = arith.subf %28, %30 : vector<4x1xf32>
      %cst_23 = arith.constant dense<0.000000e+00> : vector<1xf32>
      %32 = vector.multi_reduction <add>, %31, %cst_23 [0] : vector<4x1xf32> to vector<1xf32>
      %33 = vector.shape_cast %32 : vector<1xf32> to vector<1x1xf32>
      %cst_24 = arith.constant 2.500000e-01 : f32
      %34 = vector.broadcast %cst_24 : f32 to vector<1x1xf32>
      %35 = arith.mulf %33, %34 : vector<1x1xf32>
      %c0_25 = arith.constant 0 : index
      %c0_26 = arith.constant 0 : index
      %c0_27 = arith.constant 0 : index
      %36 = vector.load %arg4[%c0_25, %c0_26, %c0_27] : memref<1x1x1xf32, #tpu.memory_space<vmem>>, vector<1x1x1xf32>
      %37 = vector.shape_cast %36 : vector<1x1x1xf32> to vector<1x1xf32>
      %38 = vector.shape_cast %35 : vector<1x1xf32> to vector<1x1x1xf32>
      tpu.vector_store %arg4[%c0_25, %c0_26, %c0_27], %38 {strides = array<i32>} : memref<1x1x1xf32, #tpu.memory_space<vmem>>, vector<1x1x1xf32>,
    } else {
    }
    return
  }
  func.func @transform_0(%arg0: i32, %arg1: i32) -> (i32, i32, i32) {
    %c0_i32 = arith.constant 0 : i32
    %c0_i32_0 = arith.constant 0 : i32
    %c0_i32_1 = arith.constant 0 : i32
    return %arg0, %c0_i32, %c0_i32_0 : i32, i32, i32
  }
  func.func @transform_1(%arg0: i32, %arg1: i32) -> (i32, i32, i32) {
    %c0_i32 = arith.constant 0 : i32
    %c0_i32_0 = arith.constant 0 : i32
    return %arg0, %c0_i32, %arg1 : i32, i32, i32
  }
  func.func @transform_2(%arg0: i32, %arg1: i32) -> (i32, i32, i32) {
    %c0_i32 = arith.constant 0 : i32
    %c0_i32_0 = arith.constant 0 : i32
    %c0_i32_1 = arith.constant 0 : i32
    return %arg0, %c0_i32, %c0_i32_0 : i32, i32, i32
  }
}

</mosaic_0001>

<llo_original>
// kernel: tpu_custom_call.1
$region0: #{tpu_custom_call.1}
  #allocation0 [shape = 'u32[]', space=smem, size = 0x4, offset = 0x4, fixed_abs, tag = 'smem constant byte address 0x4 - core index']
  #allocation1 [shape = 'u32[144,128]{1,0:T(1,128)}', space=vmem, size = 0x12000, scoped, tag = 'internal scratch']
  #allocation2 [shape = 'f32[4,1]{1,0:T(4,128)}', space=vmem, size = 0x800, scoped, tag = 'scratch operand']
  #allocation3 [shape = 'f32[4,1]{1,0:T(4,128)}', space=vmem, size = 0x800, scoped, tag = 'scratch operand']
  %s0 = inlined_call_operand.vmem [shape: f32[2,4,1], index: 0, kind: input, shape index: {}]
  %s1 = inlined_call_operand.hbm [shape: f32[2,4,513], index: 1, kind: input, shape index: {}]
  %s2 = inlined_call_operand.vmem [shape: f32[2,1,1], index: 2, kind: output, shape index: {}]
  %s3 = sld [smem:[#allocation0]]
  $region53: #{tpu_custom_call.1} parent=0
    _
  %s5 = ssub.s32 1, %s3
  %s6 = scalar_select 0, %s5, %s3
  $region1: #{tpu_custom_call.1} parent=0
    #allocation4 [shape = 'u8[20480]{0}', space=vmem, size = 0x5000, scoped, tag = 'input window, operand 1']
    #allocation5 [shape = 's32[2]{0}', space=sflag, size = 0x8, scoped, tag = 'scoped memory for tpu_custom_call.1']
    %7 = vsyncpa [#allocation5], 0
    %s8 = scalar_lea.sflag [#allocation5], 1
    %9 = vsyncpa %s8, 0
    loop: start=0, step=1, limit=4
    $region2: #{tpu_custom_call.1} parent=1 // loop_pre_header
      _
    $region3: #{tpu_custom_call.1} parent=1 // loop_header
      %s11 = sphi 0, %s15
      %p12 = scmp.ge.s32.totalorder %s11, 4
      %s18 = sphi 0, %s30
      %s19 = sphi 0, %s26
      %s20 = sphi 0, %s18
      %s21 = sphi 0, %s19
      %s22 = sphi 0, %s20
      %s23 = sphi 0, %s21
      %s33 = sphi 0, %s35
      %s36 = sphi 0, %s33
      %s37 = sphi 0, %s36
      %s53 = sphi 0, %s37
      %s61 = sphi 0, %s63
      %s64 = sphi 0, %s61
      %s65 = sphi 0, %s64
      %s81 = sphi 0, %s65
      %s87 = sphi 0, %s89
      %s90 = sphi 0, %s87
      %s91 = sphi 0, %s90
      %s107 = sphi 0, %s91
    $region4: #{tpu_custom_call.1} parent=1 // loop_header_branch
      %14 = sbr.rel (%p12) target = $region8
    $region5: #{tpu_custom_call.1} parent=1 // loop_body
      %s16 = ssub.s32 %s11, 1
      %s17 = ssub.s32 %s11, 2
      %s24 = sadd.s32 1, %s19
      %p25 = scmp.ge.s32.totalorder %s24, 1
      %s26 = scalar_select %p25, 0, %s24
      %s27 = sadd.s32 1, %s18
      %s28 = scalar_select %p25, %s27, %s18
      %p29 = scmp.ge.s32.totalorder %s28, 2
      %s30 = scalar_select %p29, 0, %s28
      %s31 = ssub.s32 %s18, %s30
      %p32 = scmp.eq.s32.totalorder %s31, 0
      %s34 = sadd.s32 %s33, 1
      %s35 = scalar_select %p32, %s33, %s34
      %p38 = pneg %p32
      %p39 = scmp.eq.s32.totalorder %s11, 1
      %p40 = por %p38, %p39
      %p41 = scmp.ne.s32.totalorder %s33, %s36
      %p42 = scmp.eq.s32.totalorder %s11, 0
      %p43 = por %p41, %p42
      %p44 = scmp.ne.s32.totalorder %s33, %s36
      %p45 = scmp.eq.s32.totalorder %s16, 1
      %p46 = por %p44, %p45
      %p47 = scmp.ne.s32.totalorder %s36, %s37
      %p48 = scmp.eq.s32.totalorder %s16, 0
      %p49 = por %p47, %p48
      %p50 = scmp.ne.s32.totalorder %s36, %s37
      %p51 = scmp.eq.s32.totalorder %s17, 1
      %p52 = por %p50, %p51
      %p54 = scmp.ne.s32.totalorder %s37, %s53
      %p55 = scmp.eq.s32.totalorder %s17, 0
      %p56 = por %p54, %p55
      %s57 = ssub.s32 %s18, %s30
      %s58 = ssub.s32 %s19, %s26
      %s59 = sor.u32 %s57, %s58
      %p60 = scmp.eq.s32.totalorder %s59, 0
      %s62 = sadd.s32 %s61, 1
      %s63 = scalar_select %p60, %s61, %s62
      %p66 = pneg %p60
      %p67 = scmp.eq.s32.totalorder %s11, 1
      %p68 = por %p66, %p67
      %p69 = scmp.ne.s32.totalorder %s61, %s64
      %p70 = scmp.eq.s32.totalorder %s11, 0
      %p71 = por %p69, %p70
      %p72 = scmp.ne.s32.totalorder %s61, %s64
      %p73 = scmp.eq.s32.totalorder %s16, 1
      %p74 = por %p72, %p73
      %p75 = scmp.ne.s32.totalorder %s64, %s65
      %p76 = scmp.eq.s32.totalorder %s16, 0
      %p77 = por %p75, %p76
      %p78 = scmp.ne.s32.totalorder %s64, %s65
      %p79 = scmp.eq.s32.totalorder %s17, 1
      %p80 = por %p78, %p79
      %p82 = scmp.ne.s32.totalorder %s65, %s81
      %p83 = scmp.eq.s32.totalorder %s17, 0
      %p84 = por %p82, %p83
      %s85 = ssub.s32 %s18, %s30
      %p86 = scmp.eq.s32.totalorder %s85, 0
      %s88 = sadd.s32 %s87, 1
      %s89 = scalar_select %p86, %s87, %s88
      %p92 = pneg %p86
      %p93 = scmp.eq.s32.totalorder %s11, 1
      %p94 = por %p92, %p93
      %p95 = scmp.ne.s32.totalorder %s87, %s90
      %p96 = scmp.eq.s32.totalorder %s11, 0
      %p97 = por %p95, %p96
      %p98 = scmp.ne.s32.totalorder %s87, %s90
      %p99 = scmp.eq.s32.totalorder %s16, 1
      %p100 = por %p98, %p99
      %p101 = scmp.ne.s32.totalorder %s90, %s91
      %p102 = scmp.eq.s32.totalorder %s16, 0
      %p103 = por %p101, %p102
      %p104 = scmp.ne.s32.totalorder %s90, %s91
      %p105 = scmp.eq.s32.totalorder %s17, 1
      %p106 = por %p104, %p105
      %p108 = scmp.ne.s32.totalorder %s91, %s107
      %p109 = scmp.eq.s32.totalorder %s17, 0
      %p110 = por %p108, %p109
      %p111 = scmp.le.s32.totalorder 1, %s11
      %p112 = scmp.lt.s32.totalorder %s11, 3
      %p113 = pnand %p111, %p112
      %p114 = pneg %p113
      // Predicated region
      $region9: #{tpu_custom_call.1} parent=5 // pred_check
        _
      $region10: #{tpu_custom_call.1} parent=5 // pred_check_branch
        %116 = sbr.rel (%p113) target = $region12
      $region11: #{tpu_custom_call.1} parent=5 // pred_region
        %s117 = ssub.s32 %s11, 1
      $region12: #{tpu_custom_call.1} parent=5 // pred_fallthru
        _
      %p118 = scmp.lt.s32.totalorder %s11, 2
      // Predicated region
      $region13: #{tpu_custom_call.1} parent=5 // pred_check
        %p119 = pneg %p118
      $region14: #{tpu_custom_call.1} parent=5 // pred_check_branch
        %121 = sbr.rel (%p119) target = $region16
      $region15: #{tpu_custom_call.1} parent=5 // pred_region
        // Predicated region
        $region17: #{tpu_custom_call.1} parent=15 // pred_check
          %p122 = pneg %p43
        $region18: #{tpu_custom_call.1} parent=15 // pred_check_branch
          %124 = sbr.rel (%p122) target = $region20
        $region19: #{tpu_custom_call.1} parent=15 // pred_region
          %p125 = scmp.lt.s32.totalorder %s18, 1
          %s126 = scalar_select %p125, %s18, 1
          %s127 = smul.addr %s126, 4
          %s128 = scalar_lea.vmem %s0, %s127
        $region20: #{tpu_custom_call.1} parent=15 // pred_fallthru
          _
        // Predicated region
        $region21: #{tpu_custom_call.1} parent=15 // pred_check
          %p129 = pneg %p71
        $region22: #{tpu_custom_call.1} parent=15 // pred_check_branch
          %131 = sbr.rel (%p129) target = $region24
        $region23: #{tpu_custom_call.1} parent=15 // pred_region
          %s132 = sand.u32 %s61, 1
          %s133 = scalar_lea.sflag [#allocation5], %s132
          %s134 = sand.u32 %s61, 1
          %s135 = smul.addr %s134, 20
          %s136 = scalar_lea.vmem [#allocation4], %s135
          %s137 = smul.u32 5, %s19
          %s139 = ssub.s32 320, 320
          %140 = vsyncadd %s133, %s139
          %s141 = smul.addr %s18, 5
          %s142 = sadd.s32 %s137, %s141
          %s143 = smul.addr %s142, 64
          %s144 = scalar_lea.hbm %s1, %s143
          %s146 = sshll.u32 %s136, 4
          %s147 = int_to_ptr.vmem [resolvable:$true] %s146
          %149 = dma.hbm_to_vmem [thread:$0]  %s144, 320, %s147, %s133
        $region24: #{tpu_custom_call.1} parent=15 // pred_fallthru
          _
      $region16: #{tpu_custom_call.1} parent=5 // pred_fallthru
        _
      %p150 = scmp.le.s32.totalorder 1, %s11
      %p151 = scmp.lt.s32.totalorder %s11, 3
      %p152 = pnand %p150, %p151
      %p153 = pneg %p152
      // Predicated region
      $region25: #{tpu_custom_call.1} parent=5 // pred_check
        _
      $region26: #{tpu_custom_call.1} parent=5 // pred_check_branch
        %155 = sbr.rel (%p152) target = $region28
      $region27: #{tpu_custom_call.1} parent=5 // pred_region
        %s156 = ssub.s32 %s11, 1
        %s157 = sand.u32 %s64, 1
        %s158 = scalar_lea.sflag [#allocation5], %s157
        %s159 = sand.u32 %s64, 1
        %s160 = smul.addr %s159, 20
        %s161 = scalar_lea.vmem [#allocation4], %s160
        // Predicated region
        $region29: #{tpu_custom_call.1} parent=27 // pred_check
          %p162 = pneg %p77
        $region30: #{tpu_custom_call.1} parent=27 // pred_check_branch
          %164 = sbr.rel (%p162) target = $region32
        $region31: #{tpu_custom_call.1} parent=27 // pred_region
          %165 = dma.done %s158, 320
        $region32: #{tpu_custom_call.1} parent=27 // pred_fallthru
          _
        %p166 = scmp.lt.s32.totalorder %s20, 1
        %s167 = scalar_select %p166, %s20, 1
        %s168 = smul.addr %s167, 4
        %s169 = scalar_lea.vmem %s0, %s168
        %p170 = pneg %p49
        %p171 = pneg %p46
        %s172 = sand.u32 %s64, 1
        %s173 = scalar_lea.sflag [#allocation5], %s172
        %s174 = sand.u32 %s64, 1
        %s175 = smul.addr %s174, 20
        %s176 = scalar_lea.vmem [#allocation4], %s175
        %p177 = pneg %p77
        %p178 = pneg %p74
        %p179 = pneg %p103
        %p180 = pneg %p100
        %p181 = scmp.lt.s32.totalorder %s20, 1
        %s182 = scalar_select %p181, %s20, 1
        %s183 = scalar_lea.vmem %s2, %s182
        %p184 = scmp.lt.s32.totalorder %s20, 1
        %s185 = scalar_select %p184, %s20, 1
        %s186 = smul.addr %s185, 4
        %s187 = scalar_lea.vmem %s0, %s186
        %s188 = smul.u32 5, %s21
        %p189 = scmp.lt.s32.totalorder %s20, 1
        %s190 = scalar_select %p189, %s20, 1
        %s191 = scalar_lea.vmem %s2, %s190
        %p192 = scmp.eq.s32.totalorder %s21, 0
        // Predicated region
        $region33: #{tpu_custom_call.1} parent=27 // pred_check
          %p193 = pneg %p192
        $region34: #{tpu_custom_call.1} parent=27 // pred_check_branch
          %195 = sbr.rel (%p193) target = $region36
        $region35: #{tpu_custom_call.1} parent=27 // pred_region
          %vm196 = vcmask 3072
          %197 = vst.msk [vmem:[#allocation2] sm:$0xf] %vm196, -1e+30
          %198 = vst.msk [vmem:[#allocation3] sm:$0xf] %vm196, 0.0
        $region36: #{tpu_custom_call.1} parent=27 // pred_fallthru
          _
        %v199 = vld [vmem:[%s161] sm:$0xff]
        %v200 = vld [vmem:[%s161 + $0x8] sm:$0xff]
        %v201 = vld [vmem:[%s161 + $0x10] sm:$0xf]
        %v204 = vcombine.high %v199, %v199
        %v205 = vcombine.high %v200, %v200
        %vm208 = vcmask 1043456
        %v209 = vsel %vm208, %v199, -inf
        %v210 = vsel %vm208, %v204, -inf
        %v211 = vsel %vm208, %v200, -inf
        %v212 = vsel %vm208, %v205, -inf
        %vm213 = vcmask 3072
        %v214 = vsel %vm213, %v201, -inf
        %v215 = vmax.f32 %v209, %v214
        %v216 = vmax.f32 %v215, %v210
        %v217 = vmax.f32 %v211, %v212
        %v218 = vmax.f32 %v216, %v217
        %219 = vmax.xlane.f32.xlu0 %v218
        %v220 = vpop.xlane.xlu0 %219
        %v221 = vld [vmem:[#allocation2] sm:$0xf]
        %v222 = vmax.f32 %v221, %v220
        %224 = vset.pattern.permute.xlu0 0
        %225 = vperm.xlu0 %224, %v222
        %v226 = vpop.permute.xlu0 %225
        %v228 = vunpack.c.l.s4 839922192
        %v229 = vunpack.c.0.s8 %v228
        %v230 = vlaneseq
        %v231 = vshrl.u32 %v230, 7
        %v232 = vsub.s32 %v229, %v231
        %v233 = vrot.slane %v226, %v232
        %v235 = vsub.f32 %v199, %v233
        %v236 = vsub.f32 %v200, %v233
        %v237 = vsub.f32 %v201, %v233
        %v238 = vmul.f32 %v235, 1.442695
        %v239 = vpow.pop %v238
        %v240 = vmul.f32 %v236, 1.442695
        %v241 = vpow.pop %v240
        %v242 = vmul.f32 %v237, 1.442695
        %v243 = vpow.pop %v242
        %v244 = vld [vmem:[#allocation3] sm:$0xf]
        %v245 = vsub.f32 %v221, %v222
        %v246 = vmul.f32 %v245, 1.442695
        %v247 = vpow.pop %v246
        %v248 = vmul.f32 %v244, %v247
        %v251 = vcombine.high %v239, %v239
        %v252 = vcombine.high %v241, %v241
        %v255 = vsel %vm208, %v239, 0.0
        %v256 = vsel %vm208, %v251, 0.0
        %v257 = vadd.f32 %v255, %v256
        %v258 = vsel %vm208, %v241, 0.0
        %v259 = vadd.f32 %v257, %v258
        %v260 = vsel %vm208, %v252, 0.0
        %v261 = vadd.f32 %v259, %v260
        %v262 = vsel %vm213, %v243, 0.0
        %v263 = vadd.f32 %v261, %v262
        %264 = vadd.xlane.f32.xlu0 %v263
        %v265 = vpop.xlane.xlu0 %264
        %v266 = vadd.f32 %v248, %v265
        %267 = vst.msk [vmem:[#allocation3] sm:$0xf] %vm213, %v266
        %268 = vst.msk [vmem:[#allocation2] sm:$0xf] %vm213, %v222
        // Predicated region
        $region37: #{tpu_custom_call.1} parent=27 // pred_check
          %p269 = pneg %p192
        $region38: #{tpu_custom_call.1} parent=27 // pred_check_branch
          %271 = sbr.rel (%p269) target = $region40
        $region39: #{tpu_custom_call.1} parent=27 // pred_region
          %v272 = vld [vmem:[#allocation2] sm:$0xf]
          %v273 = vld [vmem:[#allocation3] sm:$0xf]
          %v274 = vlog2.pop %v273
          %v275 = vmul.f32 %v274, 0.6931472
          %v276 = vadd.f32 %v272, %v275
          %v277 = vld [vmem:[%s187] sm:$0xf]
          %v278 = vsub.f32 %v276, %v277
          %v279 = vsel %vm213, %v278, 0.0
          %v280 = vrot.slane %v279, 4
          %v281 = vadd.f32 %v279, %v280
          %v282 = vrot.slane %v281, 2
          %v283 = vadd.f32 %v281, %v282
          %v284 = vrot.slane %v283, 1
          %v285 = vadd.f32 %v283, %v284
          %v286 = vmul.f32 %v285, 0.25
          %vm287 = vcmask 0
          %288 = vst.msk [vmem:[%s191] sm:$0x1] %vm287, %v286
        $region40: #{tpu_custom_call.1} parent=27 // pred_fallthru
          _
        %p289 = scmp.lt.s32.totalorder %s20, 1
        %s290 = scalar_select %p289, %s20, 1
        %s291 = scalar_lea.vmem %s2, %s290
        // Predicated region
        $region41: #{tpu_custom_call.1} parent=27 // pred_check
          %p292 = pneg %p100
        $region42: #{tpu_custom_call.1} parent=27 // pred_check_branch
          %294 = sbr.rel (%p292) target = $region44
        $region43: #{tpu_custom_call.1} parent=27 // pred_region
          _
        $region44: #{tpu_custom_call.1} parent=27 // pred_fallthru
          _
      $region28: #{tpu_custom_call.1} parent=5 // pred_fallthru
        _
      %p295 = scmp.le.s32.totalorder 2, %s11
      // Predicated region
      $region45: #{tpu_custom_call.1} parent=5 // pred_check
        %p296 = pneg %p295
      $region46: #{tpu_custom_call.1} parent=5 // pred_check_branch
        %298 = sbr.rel (%p296) target = $region48
      $region47: #{tpu_custom_call.1} parent=5 // pred_region
        %s299 = ssub.s32 %s11, 2
        // Predicated region
        $region49: #{tpu_custom_call.1} parent=47 // pred_check
          %p300 = pneg %p106
        $region50: #{tpu_custom_call.1} parent=47 // pred_check_branch
          %302 = sbr.rel (%p300) target = $region52
        $region51: #{tpu_custom_call.1} parent=47 // pred_region
          %p303 = scmp.lt.s32.totalorder %s22, 1
          %s304 = scalar_select %p303, %s22, 1
          %s305 = scalar_lea.vmem %s2, %s304
        $region52: #{tpu_custom_call.1} parent=47 // pred_fallthru
          _
      $region48: #{tpu_custom_call.1} parent=5 // pred_fallthru
        _
    $region6: #{tpu_custom_call.1} parent=1 // loop_footer
      %s15 = sadd.s32 1, %s11
    $region7: #{tpu_custom_call.1} parent=1 // loop_footer_branch
      %10 = sbr.rel target = $region3
    $region8: #{tpu_custom_call.1} parent=1 // loop_exit
      _
    %306 = vsyncpa [#allocation5], 1
    %s307 = scalar_lea.sflag [#allocation5], 1
    %308 = vsyncpa %s307, 1

</llo_original>
